<compile_context>
chip_gen: v5e
topology: v5e:2x2
jax: 0.10.0
libtpu: 0.0.40
codegen_flags: <defaults>
</compile_context>

<pallas_src>
import functools

import numpy as np

import jax
import jax.numpy as jnp
from jax import lax
from jax.experimental import pallas as pl
from jax.experimental.pallas import tpu as pltpu


def _head_size_list(D, num_head):
    sizes = [D // num_head] * (num_head - 1)
    sizes.append(D - sizes[0] * (num_head - 1))
    return sizes


# ----------------------------------------------------------------------------
# Fused kernel: for one (block_b, L, Dp) batch tile, run all heads' self-
# attention (scores = x_h @ x_h^T, diag + padding masked, softmax, alpha @ x_h)
# with the heads stacked along the row axis, assemble the concat layout, and
# apply the final Dp x Dp projection -- one lane-dense (block_b, L, Dp) store.
# ----------------------------------------------------------------------------
def _mhsa_kernel(x_ref, mask_ref, hm_ref, wt_ref, b_ref, o_ref, *, num_head):
    """x_ref: (Bt,L,Dp) | mask_ref: (Bt,1,L) i32 | hm_ref: (H,Dp) f32 per-head
    feature masks | wt_ref: (Dp,Dp) bf16 (=W^T, zero-padded) | b_ref: (1,Dp)
    f32 | o_ref: (Bt,L,Dp)."""
    H = num_head
    xf = x_ref[...].astype(jnp.float32)                    # (Bt, L, Dp) f32
    Bt, L, Dp = xf.shape
    xb = xf.astype(jnp.bfloat16)                           # MXU RHS operand

    hmv = hm_ref[...]                                      # (H, Dp) f32

    # Stacked masked LHS for all heads: (Bt, H*L, Dp).  Masking is f32
    # elementwise (v5e-friendly); bf16 only at the MXU operand.
    xm = jnp.concatenate([xf * hmv[h] for h in range(H)],
                         axis=1).astype(jnp.bfloat16)      # (Bt, H*L, Dp)

    # ONE MXU contraction for all heads' scores: (Bt, H*L, L).
    scores = lax.dot_general(xm, xb, (((2,), (2,)), ((0,), (0,))),
                             preferred_element_type=jnp.float32)

    # Additive masks: diagonal (self) and padded keys -> -inf, like the module.
    ql = lax.broadcasted_iota(jnp.int32, (L, L), 0)
    kl = lax.broadcasted_iota(jnp.int32, (L, L), 1)
    diag_neg = jnp.where(ql == kl, -jnp.inf, 0.0)          # (L, L) f32
    diag_neg = jnp.concatenate([diag_neg] * H, axis=0)[None]   # (1, H*L, L)
    key_neg = jnp.where(mask_ref[...] != 0, -jnp.inf, 0.0)     # (Bt, 1, L)
    scores = scores + diag_neg + key_neg

    # Row softmax (each stacked row is one (head, query) pair); stats in f32.
    # NOTE: rows whose keys are all masked yield NaN, same as torch softmax.
    m = jnp.max(scores, axis=-1, keepdims=True)            # (Bt, H*L, 1)
    p = jnp.exp(scores - m)                                # (Bt, H*L, L)
    inv = pl.reciprocal(jnp.sum(p, axis=-1, keepdims=True), approx=True)

    # ONE MXU contraction for all heads' P @ V: (Bt, H*L, Dp).
    av = lax.dot_general(p.astype(jnp.bfloat16), xb,
                         (((2,), (1,)), ((0,), (0,))),
                         preferred_element_type=jnp.float32)

    # Normalize, keep only each head's own columns, reduce over the head axis
    # directly into the dense concat layout (no narrow slices / stores).
    y_c = jnp.zeros((Bt, L, Dp), jnp.float32)
    for h in range(H):
        lo, hi = h * L, (h + 1) * L
        y_c = y_c + (av[:, lo:hi, :] * inv[:, lo:hi, :]) * hmv[h]

    # Output projection: y = y_c @ W^T + b (wt_ref already holds W^T).
    y = lax.dot_general(y_c.astype(jnp.bfloat16), wt_ref[...],
                        (((2,), (0,)), ((), ())),
                        preferred_element_type=jnp.float32)
    o_ref[...] = (y + b_ref[...]).astype(o_ref.dtype)


# ----------------------------------------------------------------------------
# Generation-aware VMEM budget + block_b selection.
# ----------------------------------------------------------------------------
def _vmem_limit_bytes():
    try:
        cap = int(pltpu.get_tpu_info().vmem_capacity_bytes)
    except Exception:
        cap = 64 * 1024 * 1024                 # conservative (v7x-sized) fallback
    if cap >= 128 * 1024 * 1024:               # v5e / v6e: 128 MiB physical
        return 96 * 1024 * 1024
    return min(48 * 1024 * 1024, (cap * 3) // 4)   # v7x: 64 MiB physical


def _estimate_step_bytes(block_b, L, Dp, H):
    """Rough per-grid-step VMEM working set (pipeline buffers + live temps)."""
    HL = H * L
    per_row = (
        4 * L * Dp * 4                   # x in + out tiles, double-buffered
        + HL * Dp * (4 + 2)              # stacked masked LHS (f32 build + bf16)
        + HL * L * (4 + 4 + 2)           # scores + p (f32) + p (bf16)
        + HL * Dp * 4                    # P@V result (f32)
        + L * Dp * (4 + 2)               # y_c f32 + bf16
    )
    fixed = (
        2 * Dp * Dp * 2                  # W^T bf16, double-buffered
        + H * Dp * 4 + Dp * 4            # head masks + bias
        + HL * L * 4                     # stacked diag mask
    )
    return block_b * per_row + fixed


def _pick_block_b(B, L, Dp, H, budget, max_block=512):
    divisors = [d for d in range(1, min(B, max_block) + 1) if B % d == 0]
    fits = [d for d in divisors
            if _estimate_step_bytes(d, L, Dp, H) <= budget] or [1]
    # Keep >= 2 grid steps when B >= 2 (feed both v7x TensorCores via the
    # parallel batch axis), and prefer an even number of grid steps.
    multi = [d for d in fits if B // d >= 2] or fits
    even = [d for d in multi if (B // d) % 2 == 0]
    return max(even if even else multi)


def multi_head_self_att(x, mask, w, b, num_head=5, block_b=None):
    """x: (B,L,D) f32/bf16, mask: (B,L) bool/int (True = padding), w: (D,D) in
    torch layout (out,in), b: (D,). Returns (B,L,D) in x.dtype."""
    B, L, D = x.shape
    H = num_head
    sizes = _head_size_list(D, H)

    # Lane-dense feature dim: zero-pad D (and W, b) to a multiple of 128 so
    # every block / VPU op / store is full-lane; MXU zero columns are free.
    Dp = ((D + 127) // 128) * 128
    pad = Dp - D
    xp = jnp.pad(x, ((0, 0), (0, 0), (0, pad))) if pad else x
    wp = jnp.pad(jnp.asarray(w), ((0, pad), (0, pad))) if pad else jnp.asarray(w)
    bp = jnp.pad(jnp.asarray(b), ((0, pad),)) if pad else jnp.asarray(b)

    wt = wp.T.astype(jnp.bfloat16)                      # (Dp_in, Dp_out) = W^T
    b2 = bp.reshape(1, Dp).astype(jnp.float32)
    mask_i32 = mask.astype(jnp.int32).reshape(B, 1, L)

    # Per-head feature-ownership masks, built once on the host (tiny input).
    hm_np = np.zeros((H, Dp), np.float32)
    start = 0
    for h, sz in enumerate(sizes):
        hm_np[h, start:start + sz] = 1.0
        start += sz
    hm = jnp.asarray(hm_np)

    vmem_limit = _vmem_limit_bytes()
    if block_b is None:
        block_b = _pick_block_b(B, L, Dp, H, budget=vmem_limit // 2)
    assert B % block_b == 0, "batch must be divisible by block_b"

    kernel = functools.partial(_mhsa_kernel, num_head=H)

    flops = B * (4 * H * L * L * Dp + 2 * L * Dp * Dp)
    transcendentals = B * H * L * (L + 1)               # exp + reciprocal
    bytes_accessed = (2 * B * L * Dp * x.dtype.itemsize + B * L * 4
                      + H * Dp * 4 + Dp * Dp * 2 + Dp * 4)

    yp = pl.pallas_call(
        kernel,
        out_shape=jax.ShapeDtypeStruct((B, L, Dp), x.dtype),
        grid=(B // block_b,),
        in_specs=[
            pl.BlockSpec((block_b, L, Dp), lambda i: (i, 0, 0)),
            pl.BlockSpec((block_b, 1, L), lambda i: (i, 0, 0)),
            pl.BlockSpec((H, Dp), lambda i: (0, 0)),
            pl.BlockSpec((Dp, Dp), lambda i: (0, 0)),
            pl.BlockSpec((1, Dp), lambda i: (0, 0)),
        ],
        out_specs=pl.BlockSpec((block_b, L, Dp), lambda i: (i, 0, 0)),
        compiler_params=pltpu.CompilerParams(
            dimension_semantics=("parallel",),
            vmem_limit_bytes=vmem_limit,
        ),
        cost_estimate=pl.CostEstimate(
            flops=flops,
            transcendentals=transcendentals,
            bytes_accessed=bytes_accessed),
    )(xp, mask_i32, hm, wt, b2)

    return yp[..., :D] if pad else yp


# ----------------------------------------------------------------------------
# Pure-JAX reference following the PyTorch forward (split / per-head self-att /
# concat / linear), mirroring the kernel's bf16 MXU operands (f32 accumulation)
# so the comparison tolerance stays tight.
# ----------------------------------------------------------------------------
def _reference(x, mask, w, b, num_head=5):
    B, L, D = x.shape
    sizes = _head_size_list(D, num_head)
    eye = jnp.eye(L, dtype=bool)
    key_mask = mask[:, None, :]                          # (B, 1, L)
    xb = x.astype(jnp.bfloat16)
    outs, start = [], 0
    for sz in sizes:
        xh = xb[:, :, start:start + sz]
        start += sz
        s = jnp.einsum("bld,bmd->blm", xh, xh,
                       preferred_element_type=jnp.float32)
        s = jnp.where(eye[None], -jnp.inf, s)
        s = jnp.where(key_mask, -jnp.inf, s)
        a = jax.nn.softmax(s, axis=2)
        outs.append(jnp.einsum("blm,bmd->bld", a.astype(jnp.bfloat16), xh,
                               preferred_element_type=jnp.float32))
    y_c = jnp.concatenate(outs, axis=-1)
    return jnp.einsum("bld,od->blo", y_c.astype(jnp.bfloat16),
                      w.astype(jnp.bfloat16),
                      preferred_element_type=jnp.float32) + b


if __name__ == "__main__":
    key = jax.random.PRNGKey(0)
    k_x, k_w, k_b = jax.random.split(key, 3)

    B, L, D, num_head = 2, 8, 32, 5      # size_list = [6, 6, 6, 6, 8]

    x = jax.random.normal(k_x, (B, L, D), dtype=jnp.float32)
    # padding mask: last 2 positions of batch 0, last 3 of batch 1 are padding
    pos = jnp.arange(L)
    lengths = jnp.array([6, 5])
    mask = pos[None, :] >= lengths[:, None]              # (B, L) bool

    # deterministic nn.Linear(D, D) params
    w = jax.random.normal(k_w, (D, D), dtype=jnp.float32) * 0.1
    b = jax.random.normal(k_b, (D,), dtype=jnp.float32) * 0.1

    y = multi_head_self_att(x, mask, w, b, num_head=num_head)
    y = jax.block_until_ready(y)

    y_ref = _reference(x, mask, w, b, num_head=num_head)
    assert y.shape == (B, L, D)
    assert jnp.allclose(y, y_ref, atol=2e-2, rtol=2e-2), "mismatch vs reference"

    print("KERNEL_OK")
</pallas_src>

<mosaic_0001>
module attributes {stable_mosaic.version = 11 : i64} {
  func.func @_mhsa_kernel(%arg0: i32, %arg1: memref<1x8x128xf32, #tpu.memory_space<vmem>>, %arg2: memref<1x1x8xi32, #tpu.memory_space<vmem>>, %arg3: memref<5x128xf32, #tpu.memory_space<vmem>>, %arg4: memref<128x128xbf16, #tpu.memory_space<vmem>>, %arg5: memref<1x128xf32, #tpu.memory_space<vmem>>, %arg6: memref<1x8x128xf32, #tpu.memory_space<vmem>>) attributes {dimension_semantics = [#tpu.dimension_semantics<parallel>], iteration_bounds = array<i64: 2>, scalar_prefetch = 0 : i64, scratch_operands = 0 : i64, tpu.core_type = #tpu.core_type<tc>, window_params = [{transform_indices = @transform_0, window_bounds = array<i64: 1, 8, 128>}, {transform_indices = @transform_1, window_bounds = array<i64: 1, 1, 8>}, {pipeline_mode = #tpu.pipeline_mode<synchronous>, transform_indices = @transform_2, window_bounds = array<i64: 5, 128>}, {pipeline_mode = #tpu.pipeline_mode<synchronous>, transform_indices = @transform_3, window_bounds = array<i64: 128, 128>}, {pipeline_mode = #tpu.pipeline_mode<synchronous>, transform_indices = @transform_4, window_bounds = array<i64: 1, 128>}, {transform_indices = @transform_5, window_bounds = array<i64: 1, 8, 128>}]} {
    %c0 = arith.constant 0 : index
    %c0_0 = arith.constant 0 : index
    %c0_1 = arith.constant 0 : index
    %0 = vector.load %arg1[%c0, %c0_0, %c0_1] : memref<1x8x128xf32, #tpu.memory_space<vmem>>, vector<1x8x128xf32>
    %1 = arith.truncf %0 : vector<1x8x128xf32> to vector<1x8x128xbf16>
    %c0_2 = arith.constant 0 : index
    %c0_3 = arith.constant 0 : index
    %2 = vector.load %arg3[%c0_2, %c0_3] : memref<5x128xf32, #tpu.memory_space<vmem>>, vector<5x128xf32>
    %3 = vector.extract_strided_slice %2 {offsets = [0, 0], sizes = [1, 128], strides = [1, 1]} : vector<5x128xf32> to vector<1x128xf32>
    %4 = vector.shape_cast %3 : vector<1x128xf32> to vector<128xf32>
    %5 = vector.shape_cast %4 : vector<128xf32> to vector<1x1x128xf32>
    %6 = vector.broadcast %5 : vector<1x1x128xf32> to vector<1x8x128xf32>
    %7 = arith.mulf %0, %6 : vector<1x8x128xf32>
    %8 = vector.extract_strided_slice %2 {offsets = [1, 0], sizes = [1, 128], strides = [1, 1]} : vector<5x128xf32> to vector<1x128xf32>
    %9 = vector.shape_cast %8 : vector<1x128xf32> to vector<128xf32>
    %10 = vector.shape_cast %9 : vector<128xf32> to vector<1x1x128xf32>
    %11 = vector.broadcast %10 : vector<1x1x128xf32> to vector<1x8x128xf32>
    %12 = arith.mulf %0, %11 : vector<1x8x128xf32>
    %13 = vector.extract_strided_slice %2 {offsets = [2, 0], sizes = [1, 128], strides = [1, 1]} : vector<5x128xf32> to vector<1x128xf32>
    %14 = vector.shape_cast %13 : vector<1x128xf32> to vector<128xf32>
    %15 = vector.shape_cast %14 : vector<128xf32> to vector<1x1x128xf32>
    %16 = vector.broadcast %15 : vector<1x1x128xf32> to vector<1x8x128xf32>
    %17 = arith.mulf %0, %16 : vector<1x8x128xf32>
    %18 = vector.extract_strided_slice %2 {offsets = [3, 0], sizes = [1, 128], strides = [1, 1]} : vector<5x128xf32> to vector<1x128xf32>
    %19 = vector.shape_cast %18 : vector<1x128xf32> to vector<128xf32>
    %20 = vector.shape_cast %19 : vector<128xf32> to vector<1x1x128xf32>
    %21 = vector.broadcast %20 : vector<1x1x128xf32> to vector<1x8x128xf32>
    %22 = arith.mulf %0, %21 : vector<1x8x128xf32>
    %23 = vector.extract_strided_slice %2 {offsets = [4, 0], sizes = [1, 128], strides = [1, 1]} : vector<5x128xf32> to vector<1x128xf32>
    %24 = vector.shape_cast %23 : vector<1x128xf32> to vector<128xf32>
    %25 = vector.shape_cast %24 : vector<128xf32> to vector<1x1x128xf32>
    %26 = vector.broadcast %25 : vector<1x1x128xf32> to vector<1x8x128xf32>
    %27 = arith.mulf %0, %26 : vector<1x8x128xf32>
    %28 = tpu.concatenate %7, %12, %17, %22, %27 in 1 : vector<1x8x128xf32>, vector<1x8x128xf32>, vector<1x8x128xf32>, vector<1x8x128xf32>, vector<1x8x128xf32> -> vector<1x40x128xf32>
    %29 = arith.truncf %28 : vector<1x40x128xf32> to vector<1x40x128xbf16>
    %cst = arith.constant dense<0.000000e+00> : vector<1x40x8xf32>
    %30 = tpu.matmul %29, %1, %cst {dimension_numbers = #tpu.dot_dimension_numbers<[2], [2], [1], [1], [0, 0, 0, 1, 1, 1], [0], [0]>} : vector<1x40x128xbf16>, vector<1x8x128xbf16>, vector<1x40x8xf32> -> vector<1x40x8xf32>
    %31 = tpu.iota {dimensions = array<i32: 0>} : vector<8x8xi32>
    %32 = tpu.iota {dimensions = array<i32: 1>} : vector<8x8xi32>
    %33 = arith.cmpi eq, %31, %32 : vector<8x8xi32>
    %cst_4 = arith.constant 0xFF800000 : f32
    %cst_5 = arith.constant 0.000000e+00 : f32
    %34 = vector.broadcast %cst_4 : f32 to vector<8x8xf32>
    %35 = vector.broadcast %cst_5 : f32 to vector<8x8xf32>
    %36 = arith.select %33, %34, %35 : vector<8x8xi1>, vector<8x8xf32>
    %37 = tpu.concatenate %36, %36, %36, %36, %36 in 0 : vector<8x8xf32>, vector<8x8xf32>, vector<8x8xf32>, vector<8x8xf32>, vector<8x8xf32> -> vector<40x8xf32>
    %38 = vector.shape_cast %37 : vector<40x8xf32> to vector<1x40x8xf32>
    %c0_6 = arith.constant 0 : index
    %c0_7 = arith.constant 0 : index
    %c0_8 = arith.constant 0 : index
    %39 = vector.load %arg2[%c0_6, %c0_7, %c0_8] : memref<1x1x8xi32, #tpu.memory_space<vmem>>, vector<1x1x8xi32>
    %c0_i32 = arith.constant 0 : i32
    %40 = vector.broadcast %c0_i32 : i32 to vector<1x1x8xi32>
    %41 = arith.cmpi ne, %39, %40 : vector<1x1x8xi32>
    %cst_9 = arith.constant 0xFF800000 : f32
    %cst_10 = arith.constant 0.000000e+00 : f32
    %42 = vector.broadcast %cst_9 : f32 to vector<1x1x8xf32>
    %43 = vector.broadcast %cst_10 : f32 to vector<1x1x8xf32>
    %44 = arith.select %41, %42, %43 : vector<1x1x8xi1>, vector<1x1x8xf32>
    %45 = arith.addf %30, %38 : vector<1x40x8xf32>
    %46 = vector.broadcast %44 : vector<1x1x8xf32> to vector<1x40x8xf32>
    %47 = arith.addf %45, %46 : vector<1x40x8xf32>
    %cst_11 = arith.constant dense<0xFF800000> : vector<1x40xf32>
    %48 = vector.multi_reduction <maximumf>, %47, %cst_11 [2] : vector<1x40x8xf32> to vector<1x40xf32>
    %49 = vector.shape_cast %48 : vector<1x40xf32> to vector<1x40x1xf32>
    %50 = vector.broadcast %49 : vector<1x40x1xf32> to vector<1x40x8xf32>
    %51 = arith.subf %47, %50 : vector<1x40x8xf32>
    %52 = math.exp %51 : vector<1x40x8xf32>
    %cst_12 = arith.constant dense<0.000000e+00> : vector<1x40xf32>
    %53 = vector.multi_reduction <add>, %52, %cst_12 [2] : vector<1x40x8xf32> to vector<1x40xf32>
    %54 = vector.shape_cast %53 : vector<1x40xf32> to vector<1x40x1xf32>
    %55 = tpu.reciprocal %54 {approx = true} : vector<1x40x1xf32> -> vector<1x40x1xf32>
    %56 = arith.truncf %52 : vector<1x40x8xf32> to vector<1x40x8xbf16>
    %cst_13 = arith.constant dense<0.000000e+00> : vector<1x40x128xf32>
    %57 = tpu.matmul %56, %1, %cst_13 {dimension_numbers = #tpu.dot_dimension_numbers<[2], [1], [1], [2], [0, 0, 0, 1, 1, 2], [0], [0]>} : vector<1x40x8xbf16>, vector<1x8x128xbf16>, vector<1x40x128xf32> -> vector<1x40x128xf32>
    %cst_14 = arith.constant 0.000000e+00 : f32
    %58 = vector.broadcast %cst_14 : f32 to vector<1x8x128xf32>
    %59 = vector.extract_strided_slice %57 {offsets = [0, 0, 0], sizes = [1, 8, 128], strides = [1, 1, 1]} : vector<1x40x128xf32> to vector<1x8x128xf32>
    %60 = vector.extract_strided_slice %55 {offsets = [0, 0, 0], sizes = [1, 8, 1], strides = [1, 1, 1]} : vector<1x40x1xf32> to vector<1x8x1xf32>
    %61 = vector.broadcast %60 : vector<1x8x1xf32> to vector<1x8x128xf32>
    %62 = arith.mulf %59, %61 : vector<1x8x128xf32>
    %63 = vector.extract_strided_slice %2 {offsets = [0, 0], sizes = [1, 128], strides = [1, 1]} : vector<5x128xf32> to vector<1x128xf32>
    %64 = vector.shape_cast %63 : vector<1x128xf32> to vector<128xf32>
    %65 = vector.shape_cast %64 : vector<128xf32> to vector<1x1x128xf32>
    %66 = vector.broadcast %65 : vector<1x1x128xf32> to vector<1x8x128xf32>
    %67 = arith.mulf %62, %66 : vector<1x8x128xf32>
    %68 = arith.addf %58, %67 : vector<1x8x128xf32>
    %69 = vector.extract_strided_slice %57 {offsets = [0, 8, 0], sizes = [1, 8, 128], strides = [1, 1, 1]} : vector<1x40x128xf32> to vector<1x8x128xf32>
    %70 = vector.extract_strided_slice %55 {offsets = [0, 8, 0], sizes = [1, 8, 1], strides = [1, 1, 1]} : vector<1x40x1xf32> to vector<1x8x1xf32>
    %71 = vector.broadcast %70 : vector<1x8x1xf32> to vector<1x8x128xf32>
    %72 = arith.mulf %69, %71 : vector<1x8x128xf32>
    %73 = vector.extract_strided_slice %2 {offsets = [1, 0], sizes = [1, 128], strides = [1, 1]} : vector<5x128xf32> to vector<1x128xf32>
    %74 = vector.shape_cast %73 : vector<1x128xf32> to vector<128xf32>
    %75 = vector.shape_cast %74 : vector<128xf32> to vector<1x1x128xf32>
    %76 = vector.broadcast %75 : vector<1x1x128xf32> to vector<1x8x128xf32>
    %77 = arith.mulf %72, %76 : vector<1x8x128xf32>
    %78 = arith.addf %68, %77 : vector<1x8x128xf32>
    %79 = vector.extract_strided_slice %57 {offsets = [0, 16, 0], sizes = [1, 8, 128], strides = [1, 1, 1]} : vector<1x40x128xf32> to vector<1x8x128xf32>
    %80 = vector.extract_strided_slice %55 {offsets = [0, 16, 0], sizes = [1, 8, 1], strides = [1, 1, 1]} : vector<1x40x1xf32> to vector<1x8x1xf32>
    %81 = vector.broadcast %80 : vector<1x8x1xf32> to vector<1x8x128xf32>
    %82 = arith.mulf %79, %81 : vector<1x8x128xf32>
    %83 = vector.extract_strided_slice %2 {offsets = [2, 0], sizes = [1, 128], strides = [1, 1]} : vector<5x128xf32> to vector<1x128xf32>
    %84 = vector.shape_cast %83 : vector<1x128xf32> to vector<128xf32>
    %85 = vector.shape_cast %84 : vector<128xf32> to vector<1x1x128xf32>
    %86 = vector.broadcast %85 : vector<1x1x128xf32> to vector<1x8x128xf32>
    %87 = arith.mulf %82, %86 : vector<1x8x128xf32>
    %88 = arith.addf %78, %87 : vector<1x8x128xf32>
    %89 = vector.extract_strided_slice %57 {offsets = [0, 24, 0], sizes = [1, 8, 128], strides = [1, 1, 1]} : vector<1x40x128xf32> to vector<1x8x128xf32>
    %90 = vector.extract_strided_slice %55 {offsets = [0, 24, 0], sizes = [1, 8, 1], strides = [1, 1, 1]} : vector<1x40x1xf32> to vector<1x8x1xf32>
    %91 = vector.broadcast %90 : vector<1x8x1xf32> to vector<1x8x128xf32>
    %92 = arith.mulf %89, %91 : vector<1x8x128xf32>
    %93 = vector.extract_strided_slice %2 {offsets = [3, 0], sizes = [1, 128], strides = [1, 1]} : vector<5x128xf32> to vector<1x128xf32>
    %94 = vector.shape_cast %93 : vector<1x128xf32> to vector<128xf32>
    %95 = vector.shape_cast %94 : vector<128xf32> to vector<1x1x128xf32>
    %96 = vector.broadcast %95 : vector<1x1x128xf32> to vector<1x8x128xf32>
    %97 = arith.mulf %92, %96 : vector<1x8x128xf32>
    %98 = arith.addf %88, %97 : vector<1x8x128xf32>
    %99 = vector.extract_strided_slice %57 {offsets = [0, 32, 0], sizes = [1, 8, 128], strides = [1, 1, 1]} : vector<1x40x128xf32> to vector<1x8x128xf32>
    %100 = vector.extract_strided_slice %55 {offsets = [0, 32, 0], sizes = [1, 8, 1], strides = [1, 1, 1]} : vector<1x40x1xf32> to vector<1x8x1xf32>
    %101 = vector.broadcast %100 : vector<1x8x1xf32> to vector<1x8x128xf32>
    %102 = arith.mulf %99, %101 : vector<1x8x128xf32>
    %103 = vector.extract_strided_slice %2 {offsets = [4, 0], sizes = [1, 128], strides = [1, 1]} : vector<5x128xf32> to vector<1x128xf32>
    %104 = vector.shape_cast %103 : vector<1x128xf32> to vector<128xf32>
    %105 = vector.shape_cast %104 : vector<128xf32> to vector<1x1x128xf32>
    %106 = vector.broadcast %105 : vector<1x1x128xf32> to vector<1x8x128xf32>
    %107 = arith.mulf %102, %106 : vector<1x8x128xf32>
    %108 = arith.addf %98, %107 : vector<1x8x128xf32>
    %109 = arith.truncf %108 : vector<1x8x128xf32> to vector<1x8x128xbf16>
    %c0_15 = arith.constant 0 : index
    %c0_16 = arith.constant 0 : index
    %110 = vector.load %arg4[%c0_15, %c0_16] : memref<128x128xbf16, #tpu.memory_space<vmem>>, vector<128x128xbf16>
    %cst_17 = arith.constant dense<0.000000e+00> : vector<1x8x128xf32>
    %111 = tpu.matmul %109, %110, %cst_17 {dimension_numbers = #tpu.dot_dimension_numbers<[2], [0], [0, 1], [1], [0, 0, 0, 1, 1, 1], [], []>} : vector<1x8x128xbf16>, vector<128x128xbf16>, vector<1x8x128xf32> -> vector<1x8x128xf32>
    %c0_18 = arith.constant 0 : index
    %c0_19 = arith.constant 0 : index
    %112 = vector.load %arg5[%c0_18, %c0_19] : memref<1x128xf32, #tpu.memory_space<vmem>>, vector<1x128xf32>
    %113 = vector.shape_cast %112 : vector<1x128xf32> to vector<1x1x128xf32>
    %114 = vector.broadcast %113 : vector<1x1x128xf32> to vector<1x8x128xf32>
    %115 = arith.addf %111, %114 : vector<1x8x128xf32>
    %c0_20 = arith.constant 0 : index
    %c0_21 = arith.constant 0 : index
    %c0_22 = arith.constant 0 : index
    %116 = vector.load %arg6[%c0_20, %c0_21, %c0_22] : memref<1x8x128xf32, #tpu.memory_space<vmem>>, vector<1x8x128xf32>
    tpu.vector_store %arg6[%c0_20, %c0_21, %c0_22], %115 {strides = array<i32>} : memref<1x8x128xf32, #tpu.memory_space<vmem>>, vector<1x8x128xf32>,
    return
  }
  func.func @transform_0(%arg0: i32) -> (i32, i32, i32) {
    %c0_i32 = arith.constant 0 : i32
    %c0_i32_0 = arith.constant 0 : i32
    %c0_i32_1 = arith.constant 0 : i32
    return %arg0, %c0_i32, %c0_i32_0 : i32, i32, i32
  }
  func.func @transform_1(%arg0: i32) -> (i32, i32, i32) {
    %c0_i32 = arith.constant 0 : i32
    %c0_i32_0 = arith.constant 0 : i32
    %c0_i32_1 = arith.constant 0 : i32
    return %arg0, %c0_i32, %c0_i32_0 : i32, i32, i32
  }
  func.func @transform_2(%arg0: i32) -> (i32, i32) {
    %c0_i32 = arith.constant 0 : i32
    %c0_i32_0 = arith.constant 0 : i32
    %c0_i32_1 = arith.constant 0 : i32
    return %c0_i32, %c0_i32_0 : i32, i32
  }
  func.func @transform_3(%arg0: i32) -> (i32, i32) {
    %c0_i32 = arith.constant 0 : i32
    %c0_i32_0 = arith.constant 0 : i32
    %c0_i32_1 = arith.constant 0 : i32
    return %c0_i32, %c0_i32_0 : i32, i32
  }
  func.func @transform_4(%arg0: i32) -> (i32, i32) {
    %c0_i32 = arith.constant 0 : i32
    %c0_i32_0 = arith.constant 0 : i32
    %c0_i32_1 = arith.constant 0 : i32
    return %c0_i32, %c0_i32_0 : i32, i32
  }
  func.func @transform_5(%arg0: i32) -> (i32, i32, i32) {
    %c0_i32 = arith.constant 0 : i32
    %c0_i32_0 = arith.constant 0 : i32
    %c0_i32_1 = arith.constant 0 : i32
    return %arg0, %c0_i32, %c0_i32_0 : i32, i32, i32
  }
}

</mosaic_0001>

<llo_original>
// kernel: tpu_custom_call.1
$region0: #{tpu_custom_call.1}
  #allocation0 [shape = 'u32[]', space=smem, size = 0x4, offset = 0x4, fixed_abs, tag = 'smem constant byte address 0x4 - core index']
  #allocation1 [shape = 'u32[72,128]{1,0:T(1,128)}', space=vmem, size = 0x9000, scoped, tag = 'internal scratch']
  %s0 = inlined_call_operand.hbm [shape: f32[2,8,128], index: 0, kind: input, shape index: {}]
  %s1 = inlined_call_operand.hbm [shape: s32[2,1,8], index: 1, kind: input, shape index: {}]
  %s2 = inlined_call_operand.hbm [shape: f32[5,128], index: 2, kind: input, shape index: {}]
  %s3 = inlined_call_operand.hbm [shape: bf16[128,128], index: 3, kind: input, shape index: {}]
  %s4 = inlined_call_operand.vmem [shape: f32[1,128], index: 4, kind: input, shape index: {}]
  %s5 = inlined_call_operand.hbm [shape: f32[2,8,128], index: 5, kind: output, shape index: {}]
  %s6 = sld [smem:[#allocation0]]
  $region69: #{tpu_custom_call.1} parent=0
    _
  %s8 = ssub.s32 1, %s6
  %s9 = scalar_select 0, %s8, %s6
  $region1: #{tpu_custom_call.1} parent=0
    #allocation2 [shape = 'u8[8192]{0}', space=vmem, size = 0x2000, scoped, tag = 'input window, operand 0']
    #allocation3 [shape = 's32[2]{0}', space=sflag, size = 0x8, scoped, tag = 'scoped memory for tpu_custom_call.1']
    #allocation4 [shape = 's32[2]{0}', space=sflag, size = 0x8, scoped, tag = 'scoped memory for tpu_custom_call.1']
    #allocation5 [shape = 'u8[1024]{0}', space=vmem, size = 0x400, scoped, tag = 'input window, operand 1']
    #allocation6 [shape = 's32[2]{0}', space=sflag, size = 0x8, scoped, tag = 'scoped memory for tpu_custom_call.1']
    #allocation7 [shape = 'u8[4096]{0}', space=vmem, size = 0x1000, scoped, tag = 'input window, operand 2, single buffered']
    #allocation8 [shape = 'u8[32768]{0}', space=vmem, size = 0x8000, scoped, tag = 'input window, operand 3, single buffered']
    #allocation9 [shape = 's32[1]{0}', space=sflag, size = 0x4, scoped, tag = 'scoped memory for tpu_custom_call.1']
    #allocation10 [shape = 'u8[8192]{0}', space=vmem, size = 0x2000, scoped, tag = 'output window, operand 0']
    %10 = vsyncpa [#allocation3], 0
    %s11 = scalar_lea.sflag [#allocation3], 1
    %12 = vsyncpa %s11, 0
    %13 = vsyncpa [#allocation6], 0
    %s14 = scalar_lea.sflag [#allocation6], 1
    %15 = vsyncpa %s14, 0
    %16 = vsyncpa [#allocation9], 0
    %17 = vsyncpa [#allocation4], 0
    %s18 = scalar_lea.sflag [#allocation4], 1
    %19 = vsyncpa %s18, 0
    loop: start=0, step=1, limit=4
    $region2: #{tpu_custom_call.1} parent=1 // loop_pre_header
      _
    $region3: #{tpu_custom_call.1} parent=1 // loop_header
      %s21 = sphi 0, %s25
      %p22 = scmp.ge.s32.totalorder %s21, 4
      %s31 = sphi 0, %s33
      %s34 = sphi 0, %s31
      %s35 = sphi 0, %s34
      %s51 = sphi 0, %s35
      %s57 = sphi 0, %s59
      %s60 = sphi 0, %s57
      %s61 = sphi 0, %s60
      %s77 = sphi 0, %s61
      %s81 = sphi 0, %s81
      %s83 = sphi 0, %s81
      %s84 = sphi 0, %s83
      %s98 = sphi 0, %s84
      %s102 = sphi 0, %s102
      %s104 = sphi 0, %s102
      %s105 = sphi 0, %s104
      %s119 = sphi 0, %s105
      %s123 = sphi 0, %s123
      %s125 = sphi 0, %s123
      %s126 = sphi 0, %s125
      %s140 = sphi 0, %s126
      %s146 = sphi 0, %s148
      %s149 = sphi 0, %s146
      %s150 = sphi 0, %s149
      %s166 = sphi 0, %s150
    $region4: #{tpu_custom_call.1} parent=1 // loop_header_branch
      %24 = sbr.rel (%p22) target = $region8
    $region5: #{tpu_custom_call.1} parent=1 // loop_body
      %s26 = ssub.s32 %s21, 1
      %s27 = ssub.s32 %s21, 2
      %s28 = sadd.s32 %s21, 1
      %s29 = ssub.s32 %s21, %s28
      %p30 = scmp.eq.s32.totalorder %s29, 0
      %s32 = sadd.s32 %s31, 1
      %s33 = scalar_select %p30, %s31, %s32
      %p36 = pneg %p30
      %p37 = scmp.eq.s32.totalorder %s21, 1
      %p38 = por %p36, %p37
      %p39 = scmp.ne.s32.totalorder %s31, %s34
      %p40 = scmp.eq.s32.totalorder %s21, 0
      %p41 = por %p39, %p40
      %p42 = scmp.ne.s32.totalorder %s31, %s34
      %p43 = scmp.eq.s32.totalorder %s26, 1
      %p44 = por %p42, %p43
      %p45 = scmp.ne.s32.totalorder %s34, %s35
      %p46 = scmp.eq.s32.totalorder %s26, 0
      %p47 = por %p45, %p46
      %p48 = scmp.ne.s32.totalorder %s34, %s35
      %p49 = scmp.eq.s32.totalorder %s27, 1
      %p50 = por %p48, %p49
      %p52 = scmp.ne.s32.totalorder %s35, %s51
      %p53 = scmp.eq.s32.totalorder %s27, 0
      %p54 = por %p52, %p53
      %s55 = ssub.s32 %s21, %s28
      %p56 = scmp.eq.s32.totalorder %s55, 0
      %s58 = sadd.s32 %s57, 1
      %s59 = scalar_select %p56, %s57, %s58
      %p62 = pneg %p56
      %p63 = scmp.eq.s32.totalorder %s21, 1
      %p64 = por %p62, %p63
      %p65 = scmp.ne.s32.totalorder %s57, %s60
      %p66 = scmp.eq.s32.totalorder %s21, 0
      %p67 = por %p65, %p66
      %p68 = scmp.ne.s32.totalorder %s57, %s60
      %p69 = scmp.eq.s32.totalorder %s26, 1
      %p70 = por %p68, %p69
      %p71 = scmp.ne.s32.totalorder %s60, %s61
      %p72 = scmp.eq.s32.totalorder %s26, 0
      %p73 = por %p71, %p72
      %p74 = scmp.ne.s32.totalorder %s60, %s61
      %p75 = scmp.eq.s32.totalorder %s27, 1
      %p76 = por %p74, %p75
      %p78 = scmp.ne.s32.totalorder %s61, %s77
      %p79 = scmp.eq.s32.totalorder %s27, 0
      %p80 = por %p78, %p79
      %s82 = sadd.s32 %s81, 1
      %p85 = scmp.eq.s32.totalorder %s21, 1
      %p86 = scmp.ne.s32.totalorder %s81, %s83
      %p87 = scmp.eq.s32.totalorder %s21, 0
      %p88 = por %p86, %p87
      %p89 = scmp.ne.s32.totalorder %s81, %s83
      %p90 = scmp.eq.s32.totalorder %s26, 1
      %p91 = por %p89, %p90
      %p92 = scmp.ne.s32.totalorder %s83, %s84
      %p93 = scmp.eq.s32.totalorder %s26, 0
      %p94 = por %p92, %p93
      %p95 = scmp.ne.s32.totalorder %s83, %s84
      %p96 = scmp.eq.s32.totalorder %s27, 1
      %p97 = por %p95, %p96
      %p99 = scmp.ne.s32.totalorder %s84, %s98
      %p100 = scmp.eq.s32.totalorder %s27, 0
      %p101 = por %p99, %p100
      %s103 = sadd.s32 %s102, 1
      %p106 = scmp.eq.s32.totalorder %s21, 1
      %p107 = scmp.ne.s32.totalorder %s102, %s104
      %p108 = scmp.eq.s32.totalorder %s21, 0
      %p109 = por %p107, %p108
      %p110 = scmp.ne.s32.totalorder %s102, %s104
      %p111 = scmp.eq.s32.totalorder %s26, 1
      %p112 = por %p110, %p111
      %p113 = scmp.ne.s32.totalorder %s104, %s105
      %p114 = scmp.eq.s32.totalorder %s26, 0
      %p115 = por %p113, %p114
      %p116 = scmp.ne.s32.totalorder %s104, %s105
      %p117 = scmp.eq.s32.totalorder %s27, 1
      %p118 = por %p116, %p117
      %p120 = scmp.ne.s32.totalorder %s105, %s119
      %p121 = scmp.eq.s32.totalorder %s27, 0
      %p122 = por %p120, %p121
      %s124 = sadd.s32 %s123, 1
      %p127 = scmp.eq.s32.totalorder %s21, 1
      %p128 = scmp.ne.s32.totalorder %s123, %s125
      %p129 = scmp.eq.s32.totalorder %s21, 0
      %p130 = por %p128, %p129
      %p131 = scmp.ne.s32.totalorder %s123, %s125
      %p132 = scmp.eq.s32.totalorder %s26, 1
      %p133 = por %p131, %p132
      %p134 = scmp.ne.s32.totalorder %s125, %s126
      %p135 = scmp.eq.s32.totalorder %s26, 0
      %p136 = por %p134, %p135
      %p137 = scmp.ne.s32.totalorder %s125, %s126
      %p138 = scmp.eq.s32.totalorder %s27, 1
      %p139 = por %p137, %p138
      %p141 = scmp.ne.s32.totalorder %s126, %s140
      %p142 = scmp.eq.s32.totalorder %s27, 0
      %p143 = por %p141, %p142
      %s144 = ssub.s32 %s21, %s28
      %p145 = scmp.eq.s32.totalorder %s144, 0
      %s147 = sadd.s32 %s146, 1
      %s148 = scalar_select %p145, %s146, %s147
      %p151 = pneg %p145
      %p152 = scmp.eq.s32.totalorder %s21, 1
      %p153 = por %p151, %p152
      %p154 = scmp.ne.s32.totalorder %s146, %s149
      %p155 = scmp.eq.s32.totalorder %s21, 0
      %p156 = por %p154, %p155
      %p157 = scmp.ne.s32.totalorder %s146, %s149
      %p158 = scmp.eq.s32.totalorder %s26, 1
      %p159 = por %p157, %p158
      %p160 = scmp.ne.s32.totalorder %s149, %s150
      %p161 = scmp.eq.s32.totalorder %s26, 0
      %p162 = por %p160, %p161
      %p163 = scmp.ne.s32.totalorder %s149, %s150
      %p164 = scmp.eq.s32.totalorder %s27, 1
      %p165 = por %p163, %p164
      %p167 = scmp.ne.s32.totalorder %s150, %s166
      %p168 = scmp.eq.s32.totalorder %s27, 0
      %p169 = por %p167, %p168
      %p170 = scmp.le.s32.totalorder 1, %s21
      %p171 = scmp.lt.s32.totalorder %s21, 3
      %p172 = pnand %p170, %p171
      %p173 = pneg %p172
      // Predicated region
      $region9: #{tpu_custom_call.1} parent=5 // pred_check
        _
      $region10: #{tpu_custom_call.1} parent=5 // pred_check_branch
        %175 = sbr.rel (%p172) target = $region12
      $region11: #{tpu_custom_call.1} parent=5 // pred_region
        %s176 = ssub.s32 %s21, 1
        // Predicated region
        $region13: #{tpu_custom_call.1} parent=11 // pred_check
          %p177 = pneg %p94
        $region14: #{tpu_custom_call.1} parent=11 // pred_check_branch
          %179 = sbr.rel (%p177) target = $region16
        $region15: #{tpu_custom_call.1} parent=11 // pred_region
          %181 = vsyncadd [#allocation6], 0
          %s183 = sshll.u32 %s2, 4
          %s184 = int_to_ptr.hbm [resolvable:$true] %s183
          %s185 = sshll.u32 [#allocation7], 4
          %s186 = int_to_ptr.vmem [resolvable:$true] %s185
          %188 = dma.hbm_to_vmem [thread:$0]  %s184, 128, %s186, [#allocation6]
        $region16: #{tpu_custom_call.1} parent=11 // pred_fallthru
          _
        // Predicated region
        $region17: #{tpu_custom_call.1} parent=11 // pred_check
          %p189 = pneg %p115
        $region18: #{tpu_custom_call.1} parent=11 // pred_check_branch
          %191 = sbr.rel (%p189) target = $region20
        $region19: #{tpu_custom_call.1} parent=11 // pred_region
          %193 = vsyncadd [#allocation9], 0
          %s194 = sshll.u32 %s3, 4
          %s195 = int_to_ptr.hbm [resolvable:$true] %s194
          %s196 = sshll.u32 [#allocation8], 4
          %s197 = int_to_ptr.vmem [resolvable:$true] %s196
          %202 = dma.hbm_to_vmem [thread:$0]  %s195, 1024, %s197, [#allocation9], 64, 64, 4
        $region20: #{tpu_custom_call.1} parent=11 // pred_fallthru
          _
        // Predicated region
        $region21: #{tpu_custom_call.1} parent=11 // pred_check
          %p203 = pneg %p136
        $region22: #{tpu_custom_call.1} parent=11 // pred_check_branch
          %205 = sbr.rel (%p203) target = $region24
        $region23: #{tpu_custom_call.1} parent=11 // pred_region
          _
        $region24: #{tpu_custom_call.1} parent=11 // pred_fallthru
          _
      $region12: #{tpu_custom_call.1} parent=5 // pred_fallthru
        _
      %p206 = scmp.lt.s32.totalorder %s21, 2
      // Predicated region
      $region25: #{tpu_custom_call.1} parent=5 // pred_check
        %p207 = pneg %p206
      $region26: #{tpu_custom_call.1} parent=5 // pred_check_branch
        %209 = sbr.rel (%p207) target = $region28
      $region27: #{tpu_custom_call.1} parent=5 // pred_region
        // Predicated region
        $region29: #{tpu_custom_call.1} parent=27 // pred_check
          %p210 = pneg %p41
        $region30: #{tpu_custom_call.1} parent=27 // pred_check_branch
          %212 = sbr.rel (%p210) target = $region32
        $region31: #{tpu_custom_call.1} parent=27 // pred_region
          %s213 = sand.u32 %s31, 1
          %s214 = scalar_lea.sflag [#allocation3], %s213
          %s215 = sand.u32 %s31, 1
          %s216 = smul.addr %s215, 8
          %s217 = scalar_lea.vmem [#allocation2], %s216
          %219 = vsyncadd %s214, 0
          %s220 = smul.addr %s21, 8
          %s221 = scalar_lea.hbm %s0, %s220
          %s223 = sshll.u32 %s221, 4
          %s224 = int_to_ptr.hbm [resolvable:$true] %s223
          %s225 = sshll.u32 %s217, 4
          %s226 = int_to_ptr.vmem [resolvable:$true] %s225
          %228 = dma.hbm_to_vmem [thread:$0]  %s224, 128, %s226, %s214
        $region32: #{tpu_custom_call.1} parent=27 // pred_fallthru
          _
        // Predicated region
        $region33: #{tpu_custom_call.1} parent=27 // pred_check
          %p229 = pneg %p67
        $region34: #{tpu_custom_call.1} parent=27 // pred_check_branch
          %231 = sbr.rel (%p229) target = $region36
        $region35: #{tpu_custom_call.1} parent=27 // pred_region
          %s232 = sand.u32 %s21, 1
          %s233 = scalar_lea.sflag [#allocation6], %s232
          %s234 = sand.u32 %s57, 1
          %s235 = scalar_lea.vmem [#allocation5], %s234
          %237 = vsyncadd %s233, 0
          %s238 = scalar_lea.hbm %s1, %s21
          %s240 = sshll.u32 %s238, 4
          %s241 = int_to_ptr.hbm [resolvable:$true] %s240
          %s242 = sshll.u32 %s235, 4
          %s243 = int_to_ptr.vmem [resolvable:$true] %s242
          %245 = dma.hbm_to_vmem [thread:$0]  %s241, 16, %s243, %s233
        $region36: #{tpu_custom_call.1} parent=27 // pred_fallthru
          _
      $region28: #{tpu_custom_call.1} parent=5 // pred_fallthru
        _
      %p246 = scmp.le.s32.totalorder 1, %s21
      %p247 = scmp.lt.s32.totalorder %s21, 3
      %p248 = pnand %p246, %p247
      %p249 = pneg %p248
      // Predicated region
      $region37: #{tpu_custom_call.1} parent=5 // pred_check
        _
      $region38: #{tpu_custom_call.1} parent=5 // pred_check_branch
        %251 = sbr.rel (%p248) target = $region40
      $region39: #{tpu_custom_call.1} parent=5 // pred_region
        %s252 = ssub.s32 %s21, 1
        %s253 = sand.u32 %s34, 1
        %s254 = scalar_lea.sflag [#allocation3], %s253
        %s255 = sand.u32 %s34, 1
        %s256 = smul.addr %s255, 8
        %s257 = scalar_lea.vmem [#allocation2], %s256
        // Predicated region
        $region41: #{tpu_custom_call.1} parent=39 // pred_check
          %p258 = pneg %p47
        $region42: #{tpu_custom_call.1} parent=39 // pred_check_branch
          %260 = sbr.rel (%p258) target = $region44
        $region43: #{tpu_custom_call.1} parent=39 // pred_region
          %262 = dma.done %s254, 128
        $region44: #{tpu_custom_call.1} parent=39 // pred_fallthru
          _
        %s263 = sand.u32 %s26, 1
        %s264 = scalar_lea.sflag [#allocation6], %s263
        %s265 = sand.u32 %s60, 1
        %s266 = scalar_lea.vmem [#allocation5], %s265
        // Predicated region
        $region45: #{tpu_custom_call.1} parent=39 // pred_check
          %p267 = pneg %p73
        $region46: #{tpu_custom_call.1} parent=39 // pred_check_branch
          %269 = sbr.rel (%p267) target = $region48
        $region47: #{tpu_custom_call.1} parent=39 // pred_region
          %271 = dma.done %s264, 16
        $region48: #{tpu_custom_call.1} parent=39 // pred_fallthru
          _
        // Predicated region
        $region49: #{tpu_custom_call.1} parent=39 // pred_check
          %p272 = pneg %p94
        $region50: #{tpu_custom_call.1} parent=39 // pred_check_branch
          %274 = sbr.rel (%p272) target = $region52
        $region51: #{tpu_custom_call.1} parent=39 // pred_region
          %276 = dma.done [#allocation6], 128
        $region52: #{tpu_custom_call.1} parent=39 // pred_fallthru
          _
        // Predicated region
        $region53: #{tpu_custom_call.1} parent=39 // pred_check
          %p277 = pneg %p115
        $region54: #{tpu_custom_call.1} parent=39 // pred_check_branch
          %279 = sbr.rel (%p277) target = $region56
        $region55: #{tpu_custom_call.1} parent=39 // pred_region
          %281 = dma.done [#allocation9], 1024
        $region56: #{tpu_custom_call.1} parent=39 // pred_fallthru
          _
        %s282 = sand.u32 %s34, 1
        %s283 = scalar_lea.sflag [#allocation3], %s282
        %s284 = sand.u32 %s34, 1
        %s285 = smul.addr %s284, 8
        %s286 = scalar_lea.vmem [#allocation2], %s285
        %p287 = pneg %p47
        %p288 = pneg %p44
        %s289 = sand.u32 %s26, 1
        %s290 = scalar_lea.sflag [#allocation6], %s289
        %s291 = sand.u32 %s60, 1
        %s292 = scalar_lea.vmem [#allocation5], %s291
        %p293 = pneg %p73
        %p294 = pneg %p70
        %p295 = pneg %p94
        %p296 = pneg %p91
        %p297 = pneg %p115
        %p298 = pneg %p112
        %p299 = pneg %p136
        %p300 = pneg %p133
        %p301 = pneg %p162
        %p302 = pneg %p159
        %s303 = sand.u32 %s149, 1
        %s304 = scalar_lea.sflag [#allocation4], %s303
        %s305 = sand.u32 %s149, 1
        %s306 = smul.addr %s305, 8
        %s307 = scalar_lea.vmem [#allocation10], %s306
        %v309 = vld [vmem:[%s257] sm:$0xff]
        %v310 = vpack.c.bf16 %v309, %v309
        %v311 = vld [vmem:[#allocation7] sm:$0x1f]
        %v312 = vperm.slane %v311, 0
        %v313 = vmul.f32 %v309, %v312
        %v314 = vperm.slane %v311, 1
        %v315 = vmul.f32 %v309, %v314
        %v316 = vperm.slane %v311, 2
        %v317 = vmul.f32 %v309, %v316
        %v318 = vperm.slane %v311, 3
        %v319 = vmul.f32 %v309, %v318
        %v320 = vperm.slane %v311, 4
        %v321 = vmul.f32 %v309, %v320
        %v322 = vpack.c.bf16 %v313, %v313
        %v323 = vpack.c.bf16 %v315, %v315
        %v324 = vpack.c.bf16 %v317, %v317
        %v325 = vpack.c.bf16 %v319, %v319
        %v326 = vpack.c.bf16 %v321, %v321
        %v327 = vlaneseq
        %v328 = vshrl.u32 %v327, 7
        %v329 = vlaneseq
        %v330 = vand.u32 %v329, 127
        %vm331 = vcmp.eq.s32.totalorder %v328, %v330
        %v332 = vsel %vm331, -inf, 0.0
        %v333 = vld [vmem:[%s266] sm:$0x1]
        %vm334 = vcmp.ne.s32.totalorder %v333, 0
        %v335 = vsel %vm334, -inf, 0.0
        %v341 = vunpack.c.l.b16 %v322
        %v342 = vunpack.c.l.b16 %v323
        %v343 = vunpack.c.l.b16 %v324
        %v344 = vunpack.c.l.b16 %v325
        %v345 = vunpack.c.l.b16 %v326
        %v346 = vpack.c.b16 %v342, %v341
        %v347 = vpack.c.b16 %v344, %v343
        %v348 = vpack.c.b16 %v345, %v345
        %352 = vmatpush.bf16.xpose.msra.mxu0 0
        %353 = vmatpush.bf16.xpose.msra.mxu0 0
        %354 = vmatpush.bf16.xpose.msra.mxu0 0
        %355 = vmatpush.bf16.xpose.msra.mxu0 0
        %356 = vmatpush.bf16.xpose.msra.mxu0 0
        %357 = vmatpush.bf16.xpose.msra.mxu0 0
        %358 = vmatpush.bf16.xpose.msra.mxu0 0
        %359 = vmatpush.bf16.xpose.msra.mxu0 %v310
        %360 = vmatmul.bf16.gmra.mxu0 %v346
        %v361 = vpop.f32.mrf.mxu0
        %v362 = vadd.f32 %v332, %v361
        %v363 = vpop.f32.mrf.mxu0
        %v364 = vadd.f32 %v332, %v363
        %365 = vmatmul.bf16.gmra.mxu0 %v347
        %v366 = vpop.f32.mrf.mxu0
        %v367 = vadd.f32 %v332, %v366
        %v368 = vpop.f32.mrf.mxu0
        %v369 = vadd.f32 %v332, %v368
        %370 = vmatmul.bf16.gmra.mxu0 %v348
        %v371 = vpop.f32.mrf.mxu0
        %v372 = vadd.f32 %v332, %v371
        %v373 = vpop.f32.mrf.mxu0
        %374 = vdwg.mxu0
        %v376 = vperm.slane %v335, 0
        %v378 = vadd.f32 %v362, %v376
        %v379 = vadd.f32 %v364, %v376
        %v380 = vadd.f32 %v367, %v376
        %v381 = vadd.f32 %v369, %v376
        %v382 = vadd.f32 %v372, %v376
        %vm383 = vcmask 64512
        %v384 = vsel %vm383, %v378, -inf
        %385 = vmax.xlane.f32.xlu0 %v384
        %v386 = vpop.xlane.xlu0 %385
        %v387 = vsel %vm383, %v379, -inf
        %388 = vmax.xlane.f32.xlu0 %v387
        %v389 = vpop.xlane.xlu0 %388
        %v390 = vsel %vm383, %v380, -inf
        %391 = vmax.xlane.f32.xlu0 %v390
        %v392 = vpop.xlane.xlu0 %391
        %v393 = vsel %vm383, %v381, -inf
        %394 = vmax.xlane.f32.xlu0 %v393
        %v395 = vpop.xlane.xlu0 %394
        %v396 = vsel %vm383, %v382, -inf
        %397 = vmax.xlane.f32.xlu0 %v396
        %v398 = vpop.xlane.xlu0 %397
        %v399 = vsub.f32 %v378, %v386
        %v400 = vsub.f32 %v379, %v389
        %v401 = vsub.f32 %v380, %v392
        %v402 = vsub.f32 %v381, %v395
        %v403 = vsub.f32 %v382, %v398
        %v404 = vmul.f32 %v399, 1.442695
        %v405 = vpow.pop %v404
        %v406 = vmul.f32 %v400, 1.442695
        %v407 = vpow.pop %v406
        %v408 = vmul.f32 %v401, 1.442695
        %v409 = vpow.pop %v408
        %v410 = vmul.f32 %v402, 1.442695
        %v411 = vpow.pop %v410
        %v412 = vmul.f32 %v403, 1.442695
        %v413 = vpow.pop %v412
        %v414 = vsel %vm383, %v405, 0.0
        %415 = vadd.xlane.f32.xlu0 %v414
        %v416 = vpop.xlane.xlu0 %415
        %v417 = vsel %vm383, %v407, 0.0
        %418 = vadd.xlane.f32.xlu0 %v417
        %v419 = vpop.xlane.xlu0 %418
        %v420 = vsel %vm383, %v409, 0.0
        %421 = vadd.xlane.f32.xlu0 %v420
        %v422 = vpop.xlane.xlu0 %421
        %v423 = vsel %vm383, %v411, 0.0
        %424 = vadd.xlane.f32.xlu0 %v423
        %v425 = vpop.xlane.xlu0 %424
        %v426 = vsel %vm383, %v413, 0.0
        %427 = vadd.xlane.f32.xlu0 %v426
        %v428 = vpop.xlane.xlu0 %427
        %v429 = vrcp.pop %v416
        %v430 = vrcp.pop %v419
        %v431 = vrcp.pop %v422
        %v432 = vrcp.pop %v425
        %v433 = vrcp.pop %v428
        %v434 = vpack.c.bf16 %v405, %v405
        %v435 = vpack.c.bf16 %v407, %v407
        %v436 = vpack.c.bf16 %v409, %v409
        %v437 = vpack.c.bf16 %v411, %v411
        %v438 = vpack.c.bf16 %v413, %v413
        %v444 = vunpack.c.l.b16 %v434
        %v445 = vunpack.c.l.b16 %v435
        %v446 = vunpack.c.l.b16 %v436
        %v447 = vunpack.c.l.b16 %v437
        %v448 = vunpack.c.l.b16 %v438
        %v449 = vpack.c.b16 %v445, %v444
        %v450 = vpack.c.b16 %v447, %v446
        %v451 = vpack.c.b16 %v448, %v448
        %v453 = vsel %vm383, %v449, 0
        %v456 = vsel %vm383, %v450, 0
        %v459 = vsel %vm383, %v451, 0
        %vm461 = vcmask 1043456
        %v463 = vsel %vm461, %v310, 0
        %465 = vmatpush.bf16.msra.mxu0 0
        %466 = vmatpush.bf16.msra.mxu0 0
        %467 = vmatpush.bf16.msra.mxu0 0
        %468 = vmatpush.bf16.msra.mxu0 0
        %469 = vmatpush.bf16.msra.mxu0 0
        %470 = vmatpush.bf16.msra.mxu0 0
        %471 = vmatpush.bf16.msra.mxu0 0
        %472 = vmatpush.bf16.msra.mxu0 %v463
        %473 = vmatmul.bf16.gmra.mxu0 %v453
        %v474 = vpop.f32.mrf.mxu0
        %v475 = vadd.f32 0.0, %v474
        %v476 = vpop.f32.mrf.mxu0
        %v477 = vadd.f32 0.0, %v476
        %478 = vmatmul.bf16.gmra.mxu0 %v456
        %v479 = vpop.f32.mrf.mxu0
        %v480 = vadd.f32 0.0, %v479
        %v481 = vpop.f32.mrf.mxu0
        %v482 = vadd.f32 0.0, %v481
        %483 = vmatmul.bf16.gmra.mxu0 %v459
        %v484 = vpop.f32.mrf.mxu0
        %v485 = vadd.f32 0.0, %v484
        %v486 = vpop.f32.mrf.mxu0
        %487 = vdwg.mxu0
        %v488 = vmul.f32 %v475, %v429
        %v489 = vmul.f32 %v488, %v312
        %v490 = vadd.f32 %v489, 0.0
        %v491 = vmul.f32 %v477, %v430
        %v492 = vmul.f32 %v491, %v314
        %v493 = vadd.f32 %v490, %v492
        %v494 = vmul.f32 %v480, %v431
        %v495 = vmul.f32 %v494, %v316
        %v496 = vadd.f32 %v493, %v495
        %v497 = vmul.f32 %v482, %v432
        %v498 = vmul.f32 %v497, %v318
        %v499 = vadd.f32 %v496, %v498
        %v500 = vmul.f32 %v485, %v433
        %v501 = vmul.f32 %v500, %v320
        %v502 = vadd.f32 %v499, %v501
        %v503 = vpack.c.bf16 %v502, %v502
        %v504 = vld [vmem:[#allocation8] sm:$0xf]
        %v505 = vld [vmem:[#allocation8 + $0x4] sm:$0xf]
        %v506 = vld [vmem:[#allocation8 + $0x8] sm:$0xf]
        %v507 = vld [vmem:[#allocation8 + $0xc] sm:$0xf]
        %v508 = vld [vmem:[#allocation8 + $0x10] sm:$0xf]
        %v509 = vld [vmem:[#allocation8 + $0x14] sm:$0xf]
        %v510 = vld [vmem:[#allocation8 + $0x18] sm:$0xf]
        %v511 = vld [vmem:[#allocation8 + $0x1c] sm:$0xf]
        %v512 = vld [vmem:[#allocation8 + $0x20] sm:$0xf]
        %v513 = vld [vmem:[#allocation8 + $0x24] sm:$0xf]
        %v514 = vld [vmem:[#allocation8 + $0x28] sm:$0xf]
        %v515 = vld [vmem:[#allocation8 + $0x2c] sm:$0xf]
        %v516 = vld [vmem:[#allocation8 + $0x30] sm:$0xf]
        %v517 = vld [vmem:[#allocation8 + $0x34] sm:$0xf]
        %v518 = vld [vmem:[#allocation8 + $0x38] sm:$0xf]
        %v519 = vld [vmem:[#allocation8 + $0x3c] sm:$0xf]
        %v520 = vld [vmem:[%s4] sm:$0x1]
        %v522 = vperm.slane %v520, 0
        %v540 = vunpack.c.l.b16 %v504
        %v541 = vunpack.c.l.b16 %v505
        %v542 = vunpack.c.l.b16 %v506
        %v543 = vunpack.c.l.b16 %v507
        %v544 = vunpack.c.l.b16 %v508
        %v545 = vunpack.c.l.b16 %v509
        %v546 = vunpack.c.l.b16 %v510
        %v547 = vunpack.c.l.b16 %v511
        %v548 = vunpack.c.l.b16 %v512
        %v549 = vunpack.c.l.b16 %v513
        %v550 = vunpack.c.l.b16 %v514
        %v551 = vunpack.c.l.b16 %v515
        %v552 = vunpack.c.l.b16 %v516
        %v553 = vunpack.c.l.b16 %v517
        %v554 = vunpack.c.l.b16 %v518
        %v555 = vunpack.c.l.b16 %v519
        %v556 = vpack.c.b16 %v541, %v540
        %v557 = vpack.c.b16 %v543, %v542
        %v558 = vpack.c.b16 %v545, %v544
        %v559 = vpack.c.b16 %v547, %v546
        %v560 = vpack.c.b16 %v549, %v548
        %v561 = vpack.c.b16 %v551, %v550
        %v562 = vpack.c.b16 %v553, %v552
        %v563 = vpack.c.b16 %v555, %v554
        %572 = vmatpush.bf16.msra.mxu0 %v563
        %573 = vmatpush.bf16.msra.mxu0 %v562
        %574 = vmatpush.bf16.msra.mxu0 %v561
        %575 = vmatpush.bf16.msra.mxu0 %v560
        %576 = vmatpush.bf16.msra.mxu0 %v559
        %577 = vmatpush.bf16.msra.mxu0 %v558
        %578 = vmatpush.bf16.msra.mxu0 %v557
        %579 = vmatpush.bf16.msra.mxu0 %v556
        %580 = vmatmul.bf16.gmra.mxu0 %v503
        %v581 = vpop.f32.mrf.mxu0
        %v582 = vadd.f32 %v522, %v581
        %v583 = vpop.f32.mrf.mxu0
        %584 = vdwg.mxu0
        %585 = vst [vmem:[%s307] sm:$0xff] %v582
        %s586 = sand.u32 %s149, 1
        %s587 = scalar_lea.sflag [#allocation4], %s586
        %s588 = sand.u32 %s149, 1
        %s589 = smul.addr %s588, 8
        %s590 = scalar_lea.vmem [#allocation10], %s589
        // Predicated region
        $region57: #{tpu_custom_call.1} parent=39 // pred_check
          %p591 = pneg %p159
        $region58: #{tpu_custom_call.1} parent=39 // pred_check_branch
          %593 = sbr.rel (%p591) target = $region60
        $region59: #{tpu_custom_call.1} parent=39 // pred_region
          %595 = vsyncadd %s587, 0
          %s596 = smul.addr %s26, 8
          %s597 = scalar_lea.hbm %s5, %s596
          %s599 = sshll.u32 %s590, 4
          %s600 = int_to_ptr.vmem [resolvable:$true] %s599
          %s601 = sshll.u32 %s597, 4
          %s602 = int_to_ptr.hbm [resolvable:$true] %s601
          %604 = dma.vmem_to_hbm [thread:$0]  %s600, 128, %s602, %s587
        $region60: #{tpu_custom_call.1} parent=39 // pred_fallthru
          _
      $region40: #{tpu_custom_call.1} parent=5 // pred_fallthru
        _
      %p605 = scmp.le.s32.totalorder 2, %s21
      // Predicated region
      $region61: #{tpu_custom_call.1} parent=5 // pred_check
        %p606 = pneg %p605
      $region62: #{tpu_custom_call.1} parent=5 // pred_check_branch
        %608 = sbr.rel (%p606) target = $region64
      $region63: #{tpu_custom_call.1} parent=5 // pred_region
        %s609 = ssub.s32 %s21, 2
        // Predicated region
        $region65: #{tpu_custom_call.1} parent=63 // pred_check
          %p610 = pneg %p165
        $region66: #{tpu_custom_call.1} parent=63 // pred_check_branch
          %612 = sbr.rel (%p610) target = $region68
        $region67: #{tpu_custom_call.1} parent=63 // pred_region
          %s613 = sand.u32 %s150, 1
          %s614 = scalar_lea.sflag [#allocation4], %s613
          %s615 = sand.u32 %s150, 1
          %s616 = smul.addr %s615, 8
          %s617 = scalar_lea.vmem [#allocation10], %s616
          %619 = dma.done %s614, 128
        $region68: #{tpu_custom_call.1} parent=63 // pred_fallthru
          _
      $region64: #{tpu_custom_call.1} parent=5 // pred_fallthru
        _
    $region6: #{tpu_custom_call.1} parent=1 // loop_footer
      %s25 = sadd.s32 1, %s21
    $region7: #{tpu_custom_call.1} parent=1 // loop_footer_branch
      %20 = sbr.rel target = $region3
    $region8: #{tpu_custom_call.1} parent=1 // loop_exit
      _
    %620 = vsyncpa [#allocation3], 1
    %s621 = scalar_lea.sflag [#allocation3], 1
    %622 = vsyncpa %s621, 1
    %623 = vsyncpa [#allocation6], 1
    %s624 = scalar_lea.sflag [#allocation6], 1
    %625 = vsyncpa %s624, 1
    %626 = vsyncpa [#allocation9], 1
    %627 = vsyncpa [#allocation4], 1
    %s628 = scalar_lea.sflag [#allocation4], 1
    %629 = vsyncpa %s628, 1

</llo_original>
